<compile_context>
chip_gen: v6e
topology: v6e:2x2x1
jax: 0.10.0
libtpu: 0.0.40
codegen_flags: <defaults>
</compile_context>

<pallas_src>
import functools

import jax
import jax.numpy as jnp
import numpy as np
from jax import lax
from jax.experimental import pallas as pl
from jax.experimental.pallas import tpu as pltpu


def _round_up(x: int, m: int) -> int:
    return (x + m - 1) // m * m


def _vmem_limit_bytes() -> int:
    """Generation-aware scoped-VMEM request: 3/4 of physical, capped at 100 MiB
    (=> ~48 MiB on v7x's 64 MiB/TC, ~96 MiB on v5e/v6e's 128 MiB)."""
    try:
        cap = int(pltpu.get_tpu_info().vmem_capacity_bytes)
    except Exception:
        return 48 * 1024 * 1024            # conservative, safe on every gen
    return min(cap * 3 // 4, 100 * 1024 * 1024)


def _resident_spec(shape, index_map):
    """BlockSpec for a grid-invariant operand: fetched once and single-buffered
    (Buffered(1)) so it does not pay the default 2x double-buffer VMEM cost."""
    try:
        return pl.BlockSpec(shape, index_map, pipeline_mode=pl.Buffered(1))
    except TypeError:                       # older jax without pipeline_mode
        return pl.BlockSpec(shape, index_map)


# --------------------------------------------------------------------------- #
# K / V projection kernel, gridded over rows of the input.
# --------------------------------------------------------------------------- #
def _kv_project_kernel(x_ref, wk_ref, wv_ref, k_ref, v_ref, *, mxu_dtype):
    x = x_ref[...].astype(mxu_dtype)
    # Weights pre-transposed in the wrapper -> plain x @ W, no in-kernel .T.
    k_ref[...] = jnp.dot(x, wk_ref[...],
                         preferred_element_type=jnp.float32).astype(k_ref.dtype)
    v_ref[...] = jnp.dot(x, wv_ref[...],
                         preferred_element_type=jnp.float32).astype(v_ref.dtype)


def _project_kv(x, wk_t, wv_t, *, tile_n: int, mxu_dtype, vmem_limit: int):
    n, d_model = x.shape
    tn = min(tile_n, _round_up(n, 8))
    n_pad = _round_up(n, tn)
    x_p = jnp.pad(x, ((0, n_pad - n), (0, 0))) if n_pad != n else x
    grid = (n_pad // tn,)

    itemsize = jnp.dtype(mxu_dtype).itemsize
    cost = pl.CostEstimate(
        flops=int(2 * 2 * n_pad * d_model * d_model),
        transcendentals=0,
        bytes_accessed=int(4 * x_p.size
                           + itemsize * (wk_t.size + wv_t.size)
                           + 2 * itemsize * n_pad * d_model),
    )

    k, v = pl.pallas_call(
        functools.partial(_kv_project_kernel, mxu_dtype=mxu_dtype),
        out_shape=(jax.ShapeDtypeStruct((n_pad, d_model), mxu_dtype),
                   jax.ShapeDtypeStruct((n_pad, d_model), mxu_dtype)),
        grid_spec=pltpu.PrefetchScalarGridSpec(
            num_scalar_prefetch=0,
            grid=grid,
            in_specs=[
                pl.BlockSpec((tn, d_model), lambda i: (i, 0)),            # x tile
                _resident_spec((d_model, d_model), lambda i: (0, 0)),     # W_K^T
                _resident_spec((d_model, d_model), lambda i: (0, 0)),     # W_V^T
            ],
            out_specs=(pl.BlockSpec((tn, d_model), lambda i: (i, 0)),     # K
                       pl.BlockSpec((tn, d_model), lambda i: (i, 0))),    # V
        ),
        compiler_params=pltpu.CompilerParams(
            dimension_semantics=("parallel",),
            vmem_limit_bytes=vmem_limit,
        ),
        cost_estimate=cost,
    )(x_p, wk_t, wv_t)

    if n_pad != n:                          # drop padded rows so they cannot
        k, v = k[:n], v[:n]                 # leak into the softmax
    return k, v


# --------------------------------------------------------------------------- #
# Cross-attention + residual + LayerNorm kernel, gridded over query tiles.
# --------------------------------------------------------------------------- #
def _cross_attn_kernel(xq_ref, k_ref, v_ref, wq_ref, fc_ref, g_ref, b_ref,
                       out_ref, *, n_heads: int, d_head: int, mxu_dtype):
    x = xq_ref[...].astype(jnp.float32)                                # (TM, D)

    # One big Q projection per tile; fold 1/sqrt(d_head) into Q once.
    q = jnp.dot(x.astype(mxu_dtype), wq_ref[...],
                preferred_element_type=jnp.float32)                    # (TM, D)
    q = q * jnp.float32(1.0 / np.sqrt(d_head))

    # Per-head attention.  K/V stay lane-dense (Nkv, D); the score matmul
    # contracts the d_head axis directly ('qd,kd->qk') so there is no
    # transpose and no head-split lane padding anywhere.
    # TODO(synk): for very large n_heads, switch this static unroll to a
    #   lax.fori_loop / batched-einsum form to bound live ranges.
    ctx_heads = []
    for h in range(n_heads):
        sl = slice(h * d_head, (h + 1) * d_head)
        qh = q[:, sl].astype(mxu_dtype)                                # (TM, dh)
        s = lax.dot_general(qh, k_ref[:, sl],
                            (((1,), (1,)), ((), ())),
                            preferred_element_type=jnp.float32)        # (TM, Nk)
        s = s - jnp.max(s, axis=-1, keepdims=True)
        p = jnp.exp(s)
        denom = jnp.sum(p, axis=-1, keepdims=True)                     # (TM, 1)
        ctx_h = jnp.dot(p.astype(mxu_dtype), v_ref[:, sl],
                        preferred_element_type=jnp.float32)            # (TM, dh)
        # Deferred, exact softmax normalisation on the small (TM, dh) result.
        ctx_heads.append(ctx_h / denom)

    ctx = jnp.concatenate(ctx_heads, axis=-1)                          # (TM, D)
    y = x + jnp.dot(ctx.astype(mxu_dtype), fc_ref[...],
                    preferred_element_type=jnp.float32)

    # LayerNorm (eps = 1e-5, matching torch defaults), all in f32.
    mu = jnp.mean(y, axis=-1, keepdims=True)
    var = jnp.mean(jnp.square(y - mu), axis=-1, keepdims=True)
    yn = (y - mu) * lax.rsqrt(var + jnp.float32(1e-5))
    out_ref[...] = (yn * g_ref[...] + b_ref[...]).astype(out_ref.dtype)


def _cross_attend(xq, k, v, wq_t, fc_t, g, b, *, n_heads: int, d_head: int,
                  tile_m: int, mxu_dtype, vmem_limit: int):
    nq, d_model = xq.shape
    nkv = k.shape[0]

    tm = min(tile_m, _round_up(nq, 8))
    # Give the (parallel) query grid at least two steps when the problem is
    # large enough, so both v7x TensorCores get work.
    if _round_up(nq, tm) == tm and tm >= 16:
        tm = _round_up((tm + 1) // 2, 8)
    nq_pad = _round_up(nq, tm)
    xq_p = jnp.pad(xq, ((0, nq_pad - nq), (0, 0))) if nq_pad != nq else xq
    grid = (nq_pad // tm,)

    kernel = functools.partial(_cross_attn_kernel, n_heads=n_heads,
                               d_head=d_head, mxu_dtype=mxu_dtype)

    itemsize = jnp.dtype(mxu_dtype).itemsize
    cost = pl.CostEstimate(
        flops=int(2 * nq_pad * d_model * d_model        # Q projection
                  + 2 * nq_pad * nkv * d_model          # scores
                  + 2 * nq_pad * nkv * d_model          # attn @ V
                  + 2 * nq_pad * d_model * d_model),    # fc
        transcendentals=int(n_heads * nq_pad * nkv + 2 * nq_pad),
        bytes_accessed=int(4 * (xq_p.size + g.size + b.size + nq_pad * d_model)
                           + itemsize * (wq_t.size + fc_t.size + k.size + v.size)),
    )

    out = pl.pallas_call(
        kernel,
        out_shape=jax.ShapeDtypeStruct((nq_pad, d_model), jnp.float32),
        grid_spec=pltpu.PrefetchScalarGridSpec(
            num_scalar_prefetch=0,
            grid=grid,
            in_specs=[
                pl.BlockSpec((tm, d_model), lambda i: (i, 0)),            # x tile
                _resident_spec((nkv, d_model), lambda i: (0, 0)),         # K
                _resident_spec((nkv, d_model), lambda i: (0, 0)),         # V
                _resident_spec((d_model, d_model), lambda i: (0, 0)),     # W_Q^T
                _resident_spec((d_model, d_model), lambda i: (0, 0)),     # fc^T
                _resident_spec((1, d_model), lambda i: (0, 0)),           # gamma
                _resident_spec((1, d_model), lambda i: (0, 0)),           # beta
            ],
            out_specs=pl.BlockSpec((tm, d_model), lambda i: (i, 0)),
        ),
        compiler_params=pltpu.CompilerParams(
            dimension_semantics=("parallel",),
            vmem_limit_bytes=vmem_limit,
        ),
        cost_estimate=cost,
    )(xq_p, k, v, wq_t, fc_t, g, b)
    return out[:nq]


# --------------------------------------------------------------------------- #
# Public wrapper matching MultiHeadCrossAttention.forward(input1, input2).
# --------------------------------------------------------------------------- #
def multi_head_cross_attention(input1, input2, params, *, n_heads: int,
                               tile_m: int = 512, tile_n: int = 512,
                               mxu_dtype=jnp.bfloat16):
    """params: W_Q1, W_K1, W_V1, W_Q2, W_K2, W_V2, fc1, fc2 as (D, D) PyTorch
    nn.Linear weights (out, in); g1, b1, g2, b2 as (1, D) LayerNorm params.

    mxu_dtype=bfloat16 (default) is the right choice on ALL TPU generations
    (v5e/v6e/v7x MXUs are bf16-native); accumulation stays in f32 via
    preferred_element_type, and the residual/LayerNorm math is f32.  Pass
    mxu_dtype=jnp.float32 for bit-closer parity with the PyTorch module."""
    n1, d_model = input1.shape
    n2, d2 = input2.shape
    assert d2 == d_model and d_model % n_heads == 0
    d_head = d_model // n_heads
    vmem_limit = _vmem_limit_bytes()

    # Pre-transpose nn.Linear weights once (y = x @ W.T  ->  x @ W_t).
    def prep(w):
        return jnp.asarray(w).T.astype(mxu_dtype)

    wq1, wk1, wv1 = prep(params["W_Q1"]), prep(params["W_K1"]), prep(params["W_V1"])
    wq2, wk2, wv2 = prep(params["W_Q2"]), prep(params["W_K2"]), prep(params["W_V2"])
    fc1, fc2 = prep(params["fc1"]), prep(params["fc2"])
    g1 = jnp.asarray(params["g1"], jnp.float32)
    b1 = jnp.asarray(params["b1"], jnp.float32)
    g2 = jnp.asarray(params["g2"], jnp.float32)
    b2 = jnp.asarray(params["b2"], jnp.float32)

    x1 = jnp.asarray(input1, jnp.float32)
    x2 = jnp.asarray(input2, jnp.float32)

    # K/V of each side computed exactly once, kept lane-dense at width D.
    k1, v1 = _project_kv(x1, wk1, wv1, tile_n=tile_n, mxu_dtype=mxu_dtype,
                         vmem_limit=vmem_limit)
    k2, v2 = _project_kv(x2, wk2, wv2, tile_n=tile_n, mxu_dtype=mxu_dtype,
                         vmem_limit=vmem_limit)

    # output1: queries from input1, keys/values from input2; and vice versa.
    out1 = _cross_attend(x1, k2, v2, wq1, fc1, g1, b1, n_heads=n_heads,
                         d_head=d_head, tile_m=tile_m, mxu_dtype=mxu_dtype,
                         vmem_limit=vmem_limit)
    out2 = _cross_attend(x2, k1, v1, wq2, fc2, g2, b2, n_heads=n_heads,
                         d_head=d_head, tile_m=tile_m, mxu_dtype=mxu_dtype,
                         vmem_limit=vmem_limit)
    return out1, out2


# --------------------------------------------------------------------------- #
# Pure-JAX reference mirroring the PyTorch forward, for validation.
# --------------------------------------------------------------------------- #
def _reference(input1, input2, params, *, n_heads: int):
    d_model = input1.shape[-1]
    d_head = d_model // n_heads

    def lin(x, w):
        return x @ w.T

    def split_heads(x):
        return x.reshape(x.shape[0], n_heads, d_head).transpose(1, 0, 2)

    def merge_heads(x):
        return x.transpose(1, 0, 2).reshape(x.shape[1], -1)

    Q1 = split_heads(lin(input1, params["W_Q1"]))
    K1 = split_heads(lin(input1, params["W_K1"]))
    V1 = split_heads(lin(input1, params["W_V1"]))
    Q2 = split_heads(lin(input2, params["W_Q2"]))
    K2 = split_heads(lin(input2, params["W_K2"]))
    V2 = split_heads(lin(input2, params["W_V2"]))

    def sdpa(Q, K, V):
        scores = jnp.einsum("hnd,hmd->hnm", Q, K) / np.sqrt(d_head)
        attn = jax.nn.softmax(scores, axis=-1)
        return jnp.einsum("hnm,hmd->hnd", attn, V)

    def ln(x, g, b):
        mu = jnp.mean(x, axis=-1, keepdims=True)
        var = jnp.mean((x - mu) ** 2, axis=-1, keepdims=True)
        return (x - mu) / jnp.sqrt(var + 1e-5) * g + b

    ctx1 = merge_heads(sdpa(Q1, K2, V2))
    ctx2 = merge_heads(sdpa(Q2, K1, V1))
    o1 = ln(input1 + lin(ctx1, params["fc1"]), params["g1"], params["b1"])
    o2 = ln(input2 + lin(ctx2, params["fc2"]), params["g2"], params["b2"])
    return o1, o2


if __name__ == "__main__":
    # Small 2-D (seq, d_model) inputs consistent with the module; seq1 != seq2.
    seq1, seq2, d_model, n_heads = 8, 16, 32, 4

    key = jax.random.PRNGKey(0)
    keys = jax.random.split(key, 16)

    def w(k):
        return jax.random.normal(k, (d_model, d_model), jnp.float32) * 0.05

    params = {
        "W_Q1": w(keys[0]), "W_K1": w(keys[1]), "W_V1": w(keys[2]),
        "W_Q2": w(keys[3]), "W_K2": w(keys[4]), "W_V2": w(keys[5]),
        "fc1": w(keys[6]), "fc2": w(keys[7]),
        "g1": 1.0 + 0.1 * jax.random.normal(keys[10], (1, d_model), jnp.float32),
        "b1": 0.1 * jax.random.normal(keys[11], (1, d_model), jnp.float32),
        "g2": 1.0 + 0.1 * jax.random.normal(keys[12], (1, d_model), jnp.float32),
        "b2": 0.1 * jax.random.normal(keys[13], (1, d_model), jnp.float32),
    }

    input1 = jax.random.normal(keys[8], (seq1, d_model), jnp.float32)
    input2 = jax.random.normal(keys[9], (seq2, d_model), jnp.float32)

    ref1, ref2 = _reference(input1, input2, params, n_heads=n_heads)

    # Default (bf16 MXU operands, f32 accumulation / LN).
    out1, out2 = multi_head_cross_attention(input1, input2, params,
                                            n_heads=n_heads)
    out1, out2 = jax.block_until_ready((out1, out2))
    assert out1.shape == (seq1, d_model) and out2.shape == (seq2, d_model)
    assert jnp.allclose(out1, ref1, atol=5e-2, rtol=5e-2), "bf16 output1 mismatch"
    assert jnp.allclose(out2, ref2, atol=5e-2, rtol=5e-2), "bf16 output2 mismatch"

    # Full-f32 path (exact softmax divide, f32 MXU) for tight parity check.
    o1f, o2f = multi_head_cross_attention(input1, input2, params,
                                          n_heads=n_heads,
                                          mxu_dtype=jnp.float32)
    o1f, o2f = jax.block_until_ready((o1f, o2f))
    assert jnp.allclose(o1f, ref1, atol=2e-3, rtol=2e-3), "f32 output1 mismatch"
    assert jnp.allclose(o2f, ref2, atol=2e-3, rtol=2e-3), "f32 output2 mismatch"

    print("KERNEL_OK")
</pallas_src>

<mosaic_0001>
module attributes {stable_mosaic.version = 11 : i64} {
  func.func @_kv_project_kernel(%arg0: i32, %arg1: memref<8x32xf32, #tpu.memory_space<vmem>>, %arg2: memref<32x32xbf16, #tpu.memory_space<vmem>>, %arg3: memref<32x32xbf16, #tpu.memory_space<vmem>>, %arg4: memref<8x32xbf16, #tpu.memory_space<vmem>>, %arg5: memref<8x32xbf16, #tpu.memory_space<vmem>>) attributes {dimension_semantics = [#tpu.dimension_semantics<parallel>], iteration_bounds = array<i64: 1>, scalar_prefetch = 0 : i64, scratch_operands = 0 : i64, tpu.core_type = #tpu.core_type<tc>, window_params = [{transform_indices = @transform_0, window_bounds = array<i64: 8, 32>}, {pipeline_mode = #tpu.pipeline_mode<synchronous>, transform_indices = @transform_1, window_bounds = array<i64: 32, 32>}, {pipeline_mode = #tpu.pipeline_mode<synchronous>, transform_indices = @transform_2, window_bounds = array<i64: 32, 32>}, {transform_indices = @transform_3, window_bounds = array<i64: 8, 32>}, {transform_indices = @transform_4, window_bounds = array<i64: 8, 32>}]} {
    %c0 = arith.constant 0 : index
    %c0_0 = arith.constant 0 : index
    %0 = vector.load %arg1[%c0, %c0_0] : memref<8x32xf32, #tpu.memory_space<vmem>>, vector<8x32xf32>
    %1 = arith.truncf %0 : vector<8x32xf32> to vector<8x32xbf16>
    %c0_1 = arith.constant 0 : index
    %c0_2 = arith.constant 0 : index
    %2 = vector.load %arg2[%c0_1, %c0_2] : memref<32x32xbf16, #tpu.memory_space<vmem>>, vector<32x32xbf16>
    %cst = arith.constant dense<0.000000e+00> : vector<8x32xf32>
    %3 = tpu.matmul %1, %2, %cst {dimension_numbers = #tpu.dot_dimension_numbers<[1], [0], [0], [1], [0, 0, 1, 1], [], []>} : vector<8x32xbf16>, vector<32x32xbf16>, vector<8x32xf32> -> vector<8x32xf32>
    %4 = arith.truncf %3 : vector<8x32xf32> to vector<8x32xbf16>
    %c0_3 = arith.constant 0 : index
    %c0_4 = arith.constant 0 : index
    %5 = vector.load %arg4[%c0_3, %c0_4] : memref<8x32xbf16, #tpu.memory_space<vmem>>, vector<8x32xbf16>
    tpu.vector_store %arg4[%c0_3, %c0_4], %4 {strides = array<i32>} : memref<8x32xbf16, #tpu.memory_space<vmem>>, vector<8x32xbf16>,
    %c0_5 = arith.constant 0 : index
    %c0_6 = arith.constant 0 : index
    %6 = vector.load %arg3[%c0_5, %c0_6] : memref<32x32xbf16, #tpu.memory_space<vmem>>, vector<32x32xbf16>
    %cst_7 = arith.constant dense<0.000000e+00> : vector<8x32xf32>
    %7 = tpu.matmul %1, %6, %cst_7 {dimension_numbers = #tpu.dot_dimension_numbers<[1], [0], [0], [1], [0, 0, 1, 1], [], []>} : vector<8x32xbf16>, vector<32x32xbf16>, vector<8x32xf32> -> vector<8x32xf32>
    %8 = arith.truncf %7 : vector<8x32xf32> to vector<8x32xbf16>
    %c0_8 = arith.constant 0 : index
    %c0_9 = arith.constant 0 : index
    %9 = vector.load %arg5[%c0_8, %c0_9] : memref<8x32xbf16, #tpu.memory_space<vmem>>, vector<8x32xbf16>
    tpu.vector_store %arg5[%c0_8, %c0_9], %8 {strides = array<i32>} : memref<8x32xbf16, #tpu.memory_space<vmem>>, vector<8x32xbf16>,
    return
  }
  func.func @transform_0(%arg0: i32) -> (i32, i32) {
    %c0_i32 = arith.constant 0 : i32
    %c0_i32_0 = arith.constant 0 : i32
    return %arg0, %c0_i32 : i32, i32
  }
  func.func @transform_1(%arg0: i32) -> (i32, i32) {
    %c0_i32 = arith.constant 0 : i32
    %c0_i32_0 = arith.constant 0 : i32
    %c0_i32_1 = arith.constant 0 : i32
    return %c0_i32, %c0_i32_0 : i32, i32
  }
  func.func @transform_2(%arg0: i32) -> (i32, i32) {
    %c0_i32 = arith.constant 0 : i32
    %c0_i32_0 = arith.constant 0 : i32
    %c0_i32_1 = arith.constant 0 : i32
    return %c0_i32, %c0_i32_0 : i32, i32
  }
  func.func @transform_3(%arg0: i32) -> (i32, i32) {
    %c0_i32 = arith.constant 0 : i32
    %c0_i32_0 = arith.constant 0 : i32
    return %arg0, %c0_i32 : i32, i32
  }
  func.func @transform_4(%arg0: i32) -> (i32, i32) {
    %c0_i32 = arith.constant 0 : i32
    %c0_i32_0 = arith.constant 0 : i32
    return %arg0, %c0_i32 : i32, i32
  }
}

</mosaic_0001>

<llo_original>
// kernel: tpu_custom_call.1
$region0: #{tpu_custom_call.1}
  #allocation0 [shape = 'u32[]', space=smem, size = 0x4, offset = 0x4, fixed_abs, tag = 'smem constant byte address 0x4 - core index']
  #allocation1 [shape = 'u32[144,128]{1,0:T(1,128)}', space=vmem, size = 0x12000, scoped, tag = 'internal scratch']
  %s0 = inlined_call_operand.hbm [shape: f32[8,32], index: 0, kind: input, shape index: {}]
  %s1 = inlined_call_operand.hbm [shape: bf16[32,32], index: 1, kind: input, shape index: {}]
  %s2 = inlined_call_operand.hbm [shape: bf16[32,32], index: 2, kind: input, shape index: {}]
  %s3 = inlined_call_operand.hbm [shape: bf16[8,32], index: 3, kind: output, shape index: {0}]
  %s4 = inlined_call_operand.hbm [shape: bf16[8,32], index: 4, kind: output, shape index: {1}]
  %5 = xla_tuple %s3, %s4
  %s6 = sld [smem:[#allocation0]]
  $region42: #{tpu_custom_call.1} parent=0
    _
  %s8 = ssub.s32 1, %s6
  %s9 = scalar_select 0, %s8, %s6
  $region1: #{tpu_custom_call.1} parent=0
    #allocation2 [shape = 'u8[4096]{0}', space=vmem, size = 0x1000, scoped, tag = 'input window, operand 0, single buffered']
    #allocation3 [shape = 's32[1]{0}', space=sflag, size = 0x4, scoped, tag = 'scoped memory for tpu_custom_call.1']
    #allocation4 [shape = 's32[1]{0}', space=sflag, size = 0x4, scoped, tag = 'scoped memory for tpu_custom_call.1']
    #allocation5 [shape = 'u8[8192]{0}', space=vmem, size = 0x2000, scoped, tag = 'input window, operand 1, single buffered']
    #allocation6 [shape = 's32[1]{0}', space=sflag, size = 0x4, scoped, tag = 'scoped memory for tpu_custom_call.1']
    #allocation7 [shape = 'u8[8192]{0}', space=vmem, size = 0x2000, scoped, tag = 'input window, operand 2, single buffered']
    #allocation8 [shape = 'u8[2048]{0}', space=vmem, size = 0x800, scoped, tag = 'output window, operand 0, single buffered']
    #allocation9 [shape = 'u8[2048]{0}', space=vmem, size = 0x800, scoped, tag = 'output window, operand 1, single buffered']
    #allocation10 [shape = 's32[1]{0}', space=sflag, size = 0x4, scoped, tag = 'scoped memory for tpu_custom_call.1']
    %10 = vsyncpa [#allocation3], 0
    %11 = vsyncpa [#allocation6], 0
    %12 = vsyncpa [#allocation4], 0
    %13 = vsyncpa [#allocation10], 0
    // Predicated region
    $region2: #{tpu_custom_call.1} parent=1 // pred_check
      _
    $region3: #{tpu_custom_call.1} parent=1 // pred_check_branch
      %15 = sbr.rel (0) target = $region5
    $region4: #{tpu_custom_call.1} parent=1 // pred_region
      %s17 = ssub.s32 128, 128
      %18 = vsyncadd [#allocation3], %s17
      %s20 = sshll.u32 [#allocation2], 4
      %s21 = int_to_ptr.vmem [resolvable:$true] %s20
      %23 = dma.hbm_to_vmem [thread:$0]  %s0, 128, %s21, [#allocation3]
    $region5: #{tpu_custom_call.1} parent=1 // pred_fallthru
      _
    // Predicated region
    $region6: #{tpu_custom_call.1} parent=1 // pred_check
      _
    $region7: #{tpu_custom_call.1} parent=1 // pred_check_branch
      %25 = sbr.rel (0) target = $region9
    $region8: #{tpu_custom_call.1} parent=1 // pred_region
      %s27 = ssub.s32 256, 256
      %28 = vsyncadd [#allocation6], %s27
      %s29 = sshll.u32 [#allocation5], 4
      %s30 = int_to_ptr.vmem [resolvable:$true] %s29
      %35 = dma.hbm_to_vmem [thread:$0]  %s1, 256, %s30, [#allocation6], 64, 64, 4
    $region9: #{tpu_custom_call.1} parent=1 // pred_fallthru
      _
    // Predicated region
    $region10: #{tpu_custom_call.1} parent=1 // pred_check
      _
    $region11: #{tpu_custom_call.1} parent=1 // pred_check_branch
      %37 = sbr.rel (0) target = $region13
    $region12: #{tpu_custom_call.1} parent=1 // pred_region
      %s39 = ssub.s32 256, 256
      %40 = vsyncadd [#allocation6], %s39
      %s41 = sshll.u32 [#allocation7], 4
      %s42 = int_to_ptr.vmem [resolvable:$true] %s41
      %47 = dma.hbm_to_vmem [thread:$0]  %s2, 256, %s42, [#allocation6], 64, 64, 4
    $region13: #{tpu_custom_call.1} parent=1 // pred_fallthru
      _
    // Predicated region
    $region14: #{tpu_custom_call.1} parent=1 // pred_check
      _
    $region15: #{tpu_custom_call.1} parent=1 // pred_check_branch
      %49 = sbr.rel (0) target = $region17
    $region16: #{tpu_custom_call.1} parent=1 // pred_region
      %50 = dma.done [#allocation3], 128
    $region17: #{tpu_custom_call.1} parent=1 // pred_fallthru
      _
    // Predicated region
    $region18: #{tpu_custom_call.1} parent=1 // pred_check
      _
    $region19: #{tpu_custom_call.1} parent=1 // pred_check_branch
      %52 = sbr.rel (0) target = $region21
    $region20: #{tpu_custom_call.1} parent=1 // pred_region
      %53 = dma.done [#allocation6], 256
    $region21: #{tpu_custom_call.1} parent=1 // pred_fallthru
      _
    // Predicated region
    $region22: #{tpu_custom_call.1} parent=1 // pred_check
      _
    $region23: #{tpu_custom_call.1} parent=1 // pred_check_branch
      %55 = sbr.rel (0) target = $region25
    $region24: #{tpu_custom_call.1} parent=1 // pred_region
      %56 = dma.done [#allocation6], 256
    $region25: #{tpu_custom_call.1} parent=1 // pred_fallthru
      _
    %v58 = vld [vmem:[#allocation2] sm:$0xff]
    %v59 = vpack.c.bf16 %v58, %v58
    %v60 = vld [vmem:[#allocation5] sm:$0xf]
    %v61 = vld [vmem:[#allocation5 + $0x4] sm:$0xf]
    %v62 = vld [vmem:[#allocation5 + $0x8] sm:$0xf]
    %v63 = vld [vmem:[#allocation5 + $0xc] sm:$0xf]
    %v68 = vunpack.c.l.b16 %v60
    %v69 = vunpack.c.l.b16 %v61
    %v70 = vunpack.c.l.b16 %v62
    %v71 = vunpack.c.l.b16 %v63
    %v72 = vpack.c.b16 %v69, %v68
    %v73 = vpack.c.b16 %v71, %v70
    %vm76 = vcmask 261120
    %v78 = vsel %vm76, %v59, 0
    %80 = vmatprep.subr.bf16.mxu0 0
    %81 = vmatpush1.bf16.msra.mxu0 0
    %82 = vmatprep.subr.bf16.mxu0 0
    %83 = vmatpush1.bf16.msra.mxu0 0
    %84 = vmatprep.subr.bf16.mxu0 0
    %85 = vmatpush1.bf16.msra.mxu0 0
    %86 = vmatprep.subr.bf16.mxu0 0
    %87 = vmatpush1.bf16.msra.mxu0 0
    %88 = vmatprep.subr.bf16.mxu0 0
    %89 = vmatpush1.bf16.msra.mxu0 0
    %90 = vmatprep.subr.bf16.mxu0 0
    %91 = vmatpush1.bf16.msra.mxu0 0
    %92 = vmatprep.subr.bf16.mxu0 0
    %93 = vmatpush1.bf16.msra.mxu0 %v73
    %94 = vmatprep.subr.bf16.mxu0 0
    %95 = vmatpush1.bf16.msra.mxu0 %v72
    %96 = vmatprep.subr.bf16.mxu0 0
    %97 = vmatpush2.bf16.msra.mxu0 0
    %98 = vmatprep.subr.bf16.mxu0 0
    %99 = vmatpush2.bf16.msra.mxu0 0
    %100 = vmatprep.subr.bf16.mxu0 0
    %101 = vmatpush2.bf16.msra.mxu0 0
    %102 = vmatprep.subr.bf16.mxu0 0
    %103 = vmatpush2.bf16.msra.mxu0 0
    %104 = vmatprep.subr.bf16.mxu0 0
    %105 = vmatpush2.bf16.msra.mxu0 0
    %106 = vmatprep.subr.bf16.mxu0 0
    %107 = vmatpush2.bf16.msra.mxu0 0
    %108 = vmatprep.subr.bf16.mxu0 0
    %109 = vmatpush2.bf16.msra.mxu0 0
    %110 = vmatprep.subr.bf16.mxu0 0
    %111 = vmatpush2.bf16.msra.mxu0 0
    %112 = vmatprep.mubr.bf16.mxu0 0
    %113 = vmatmul.mubr.bf16.gmra.mxu0 %v78
    %v114 = vpop.f32.mrf.mxu0
    %v115 = vadd.f32 0.0, %v114
    %v116 = vpop.f32.mrf.mxu0
    %v117 = vpop.f32.mrf.mxu0
    %v118 = vpop.f32.mrf.mxu0
    %119 = vdwg.mxu0
    %v120 = vpack.c.bf16 %v115, %v115
    %vm121 = vcmask 257024
    %122 = vst.msk [vmem:[#allocation8] sm:$0xf] %vm121, %v120
    %v123 = vld [vmem:[#allocation7] sm:$0xf]
    %v124 = vld [vmem:[#allocation7 + $0x4] sm:$0xf]
    %v125 = vld [vmem:[#allocation7 + $0x8] sm:$0xf]
    %v126 = vld [vmem:[#allocation7 + $0xc] sm:$0xf]
    %v131 = vunpack.c.l.b16 %v123
    %v132 = vunpack.c.l.b16 %v124
    %v133 = vunpack.c.l.b16 %v125
    %v134 = vunpack.c.l.b16 %v126
    %v135 = vpack.c.b16 %v132, %v131
    %v136 = vpack.c.b16 %v134, %v133
    %139 = vmatprep.subr.bf16.mxu0 0
    %140 = vmatpush1.bf16.msra.mxu0 0
    %141 = vmatprep.subr.bf16.mxu0 0
    %142 = vmatpush1.bf16.msra.mxu0 0
    %143 = vmatprep.subr.bf16.mxu0 0
    %144 = vmatpush1.bf16.msra.mxu0 0
    %145 = vmatprep.subr.bf16.mxu0 0
    %146 = vmatpush1.bf16.msra.mxu0 0
    %147 = vmatprep.subr.bf16.mxu0 0
    %148 = vmatpush1.bf16.msra.mxu0 0
    %149 = vmatprep.subr.bf16.mxu0 0
    %150 = vmatpush1.bf16.msra.mxu0 0
    %151 = vmatprep.subr.bf16.mxu0 0
    %152 = vmatpush1.bf16.msra.mxu0 %v136
    %153 = vmatprep.subr.bf16.mxu0 0
    %154 = vmatpush1.bf16.msra.mxu0 %v135
    %155 = vmatprep.subr.bf16.mxu0 0
    %156 = vmatpush2.bf16.msra.mxu0 0
    %157 = vmatprep.subr.bf16.mxu0 0
    %158 = vmatpush2.bf16.msra.mxu0 0
    %159 = vmatprep.subr.bf16.mxu0 0
    %160 = vmatpush2.bf16.msra.mxu0 0
    %161 = vmatprep.subr.bf16.mxu0 0
    %162 = vmatpush2.bf16.msra.mxu0 0
    %163 = vmatprep.subr.bf16.mxu0 0
    %164 = vmatpush2.bf16.msra.mxu0 0
    %165 = vmatprep.subr.bf16.mxu0 0
    %166 = vmatpush2.bf16.msra.mxu0 0
    %167 = vmatprep.subr.bf16.mxu0 0
    %168 = vmatpush2.bf16.msra.mxu0 0
    %169 = vmatprep.subr.bf16.mxu0 0
    %170 = vmatpush2.bf16.msra.mxu0 0
    %171 = vmatprep.mubr.bf16.mxu0 0
    %172 = vmatmul.mubr.bf16.gmra.mxu0 %v78
    %v173 = vpop.f32.mrf.mxu0
    %v174 = vadd.f32 0.0, %v173
    %v175 = vpop.f32.mrf.mxu0
    %v176 = vpop.f32.mrf.mxu0
    %v177 = vpop.f32.mrf.mxu0
    %178 = vdwg.mxu0
    %v179 = vpack.c.bf16 %v174, %v174
    %180 = vst.msk [vmem:[#allocation9] sm:$0xf] %vm121, %v179
    // Predicated region
    $region26: #{tpu_custom_call.1} parent=1 // pred_check
      _
    $region27: #{tpu_custom_call.1} parent=1 // pred_check_branch
      %182 = sbr.rel (0) target = $region29
    $region28: #{tpu_custom_call.1} parent=1 // pred_region
      %s184 = ssub.s32 64, 64
      %185 = vsyncadd [#allocation4], %s184
      %s187 = sshll.u32 [#allocation8], 4
      %s188 = int_to_ptr.vmem [resolvable:$true] %s187
      %190 = dma.vmem_to_hbm [thread:$0]  %s188, 64, %s3, [#allocation4]
    $region29: #{tpu_custom_call.1} parent=1 // pred_fallthru
      _
    // Predicated region
    $region30: #{tpu_custom_call.1} parent=1 // pred_check
      _
    $region31: #{tpu_custom_call.1} parent=1 // pred_check_branch
      %192 = sbr.rel (0) target = $region33
    $region32: #{tpu_custom_call.1} parent=1 // pred_region
      %s194 = ssub.s32 64, 64
      %195 = vsyncadd [#allocation10], %s194
      %s197 = sshll.u32 [#allocation9], 4
      %s198 = int_to_ptr.vmem [resolvable:$true] %s197
      %200 = dma.vmem_to_hbm [thread:$0]  %s198, 64, %s4, [#allocation10]
    $region33: #{tpu_custom_call.1} parent=1 // pred_fallthru
      _
    // Predicated region
    $region34: #{tpu_custom_call.1} parent=1 // pred_check
      _
    $region35: #{tpu_custom_call.1} parent=1 // pred_check_branch
      %202 = sbr.rel (0) target = $region37
    $region36: #{tpu_custom_call.1} parent=1 // pred_region
      %203 = dma.done [#allocation4], 64
    $region37: #{tpu_custom_call.1} parent=1 // pred_fallthru
      _
    // Predicated region
    $region38: #{tpu_custom_call.1} parent=1 // pred_check
      _
    $region39: #{tpu_custom_call.1} parent=1 // pred_check_branch
      %205 = sbr.rel (0) target = $region41
    $region40: #{tpu_custom_call.1} parent=1 // pred_region
      %206 = dma.done [#allocation10], 64
    $region41: #{tpu_custom_call.1} parent=1 // pred_fallthru
      _
    %207 = vsyncpa [#allocation3], 1
    %208 = vsyncpa [#allocation6], 1
    %209 = vsyncpa [#allocation4], 1
    %210 = vsyncpa [#allocation10], 1

</llo_original>
